<compile_context>
chip_gen: v6e
topology: v6e:2x2x1
jax: 0.10.0
libtpu: 0.0.40
codegen_flags: <defaults>
</compile_context>

<pallas_src>
import jax
import jax.numpy as jnp
from jax.experimental import pallas as pl
from jax.experimental.pallas import tpu as pltpu


def _round_up(x, m):
    return ((x + m - 1) // m) * m


def _round_down(x, m):
    return (x // m) * m


def _vmem_cap_bytes():
    """Chip-aware usable-VMEM cap (leaves compiler-scratch headroom)."""
    try:
        cap = pltpu.get_tpu_info().vmem_capacity_bytes
    except Exception:
        return 48 << 20                       # unknown chip: assume v7x-class 64 MiB
    if cap <= (64 << 20):                      # v7x: 64 MiB physical per TC
        return 48 << 20
    return int(min(cap - (32 << 20), 100 << 20))   # v5e/v6e: 128 MiB -> ~96 MiB usable


def _choose_batch_tile(B, per_row_bytes, fixed_bytes, vmem_cap):
    """Largest batch tile that fits the VMEM budget (big tiles amortize the
    ~0.35us/step grid overhead), >=2 steps for large B (dual-TC v7x)."""
    avail = max(vmem_cap - fixed_bytes - (2 << 20), 0)
    cap_rows = avail // max(per_row_bytes, 1)
    cap_rows = max(16, _round_down(cap_rows, 16))   # bf16 packs 16 sublanes/vreg
    tb = min(512, cap_rows)
    if B >= 32:
        # Keep at least 2 grid steps so the "parallel" batch axis can shard
        # across both TensorCores on v7x (harmless ~0.35us extra on 1-TC chips).
        tb = min(tb, _round_up((B + 1) // 2, 16))
    if tb >= B:
        tb = B                                  # full-extent block: always legal
    return tb


def mlp_multihead_kernel(x_ref, w1_ref, b1_ref, w2_ref, b2_ref,
                         wh_ref, bh_ref, out_ref):
    """One batch tile of the fused backbone + multi-head forward.

    x_ref : (TB, D)   bf16    w1_ref: (D, Hp)  bf16   b1_ref: (1, Hp) f32
    w2_ref: (Hp, Hp)  bf16                            b2_ref: (1, Hp) f32
    wh_ref: (Hp, Cp)  bf16  (all task heads fused on the lane axis)
    bh_ref: (1, Cp)   f32     out_ref: (TB, Cp) f32
    """
    # Layer 1: MXU matmul, f32 accumulate; bias add + ReLU in f32 on the VPU.
    h1 = jnp.dot(x_ref[...], w1_ref[...], preferred_element_type=jnp.float32)
    h1 = jnp.maximum(h1 + b1_ref[...], 0.0).astype(w2_ref.dtype)
    # Layer 2
    h2 = jnp.dot(h1, w2_ref[...], preferred_element_type=jnp.float32)
    h2 = jnp.maximum(h2 + b2_ref[...], 0.0).astype(wh_ref.dtype)
    # All task heads as one lane-dense (Cp % 128 == 0) matmul + single store.
    out_ref[...] = (jnp.dot(h2, wh_ref[...], preferred_element_type=jnp.float32)
                    + bh_ref[...]).astype(out_ref.dtype)


def normalnn_forward(x_nchw, params, task_names, *, compute_dtype=jnp.bfloat16,
                     out_dtype=jnp.float32, return_fused=False):
    """Runs the Pallas kernel; returns {task: (B, out_dim)} like new_logits.

    Set return_fused=True to get the (B, T, C) slab and skip the non-aligned
    per-task column slices when the consumer allows it.
    """
    w1, b1, w2, b2, wh, bh = params
    B = x_nchw.shape[0]
    # Single pass over x: reshape (layout-free) + one cast straight to bf16.
    x = x_nchw.reshape(B, -1).astype(compute_dtype)
    D = x.shape[1]
    H = w1.shape[1]
    T, _, C = wh.shape

    Hp = _round_up(H, 128)
    Cp = _round_up(T * C, 128)

    def pad2(a, r, c):
        return jnp.pad(a, ((0, r - a.shape[0]), (0, c - a.shape[1])))

    # Only weights are padded (jit-time-constant, tiny vs. activations).
    # Zero padding keeps the math exact: padded hidden units ReLU to 0 and hit
    # zero weight rows downstream; padded output columns are sliced away below.
    w1_p = pad2(w1, D, Hp).astype(compute_dtype)
    w2_p = pad2(w2, Hp, Hp).astype(compute_dtype)
    # Fuse heads: (T, H, C) -> (H, T*C); columns [t*C:(t+1)*C] belong to task t.
    wh_flat = jnp.transpose(wh, (1, 0, 2)).reshape(H, T * C)
    wh_p = pad2(wh_flat, Hp, Cp).astype(compute_dtype)
    b1_p = pad2(b1, 1, Hp).astype(jnp.float32)
    b2_p = pad2(b2, 1, Hp).astype(jnp.float32)
    bh_p = pad2(bh.reshape(1, T * C), 1, Cp).astype(jnp.float32)

    # --- VMEM budget ------------------------------------------------------
    in_it = jnp.dtype(compute_dtype).itemsize
    out_it = jnp.dtype(out_dtype).itemsize
    weight_bytes = (D * Hp + Hp * Hp + Hp * Cp) * in_it + (2 * Hp + Cp) * 4
    # Pallas double-buffers every input, even with a constant index_map, so
    # the resident weights are counted twice.
    fixed_bytes = 2 * weight_bytes
    per_row = 2 * (D * in_it + Cp * out_it)       # x tile + out tile, 2-deep
    cap = _vmem_cap_bytes()
    TB = _choose_batch_tile(B, per_row, fixed_bytes, cap)
    grid = (pl.cdiv(B, TB),)
    vmem_limit = int(min(cap, max(fixed_bytes + TB * per_row + (4 << 20),
                                  32 << 20)))
    # TODO(synk): for very large D on v7x (weights + x tile not fitting at a
    # good TB), add an inner "arbitrary" grid axis over D for layer 1 with an
    # f32 VMEM accumulator instead of shrinking TB.

    out = pl.pallas_call(
        mlp_multihead_kernel,
        out_shape=jax.ShapeDtypeStruct((B, Cp), out_dtype),
        grid_spec=pltpu.PrefetchScalarGridSpec(
            num_scalar_prefetch=0,
            grid=grid,
            in_specs=[
                pl.BlockSpec((TB, D), lambda i: (i, 0)),    # x: batch-tiled
                pl.BlockSpec((D, Hp), lambda i: (0, 0)),    # weights stay put
                pl.BlockSpec((1, Hp), lambda i: (0, 0)),
                pl.BlockSpec((Hp, Hp), lambda i: (0, 0)),
                pl.BlockSpec((1, Hp), lambda i: (0, 0)),
                pl.BlockSpec((Hp, Cp), lambda i: (0, 0)),
                pl.BlockSpec((1, Cp), lambda i: (0, 0)),
            ],
            out_specs=pl.BlockSpec((TB, Cp), lambda i: (i, 0)),
        ),
        compiler_params=pltpu.CompilerParams(
            dimension_semantics=("parallel",),
            vmem_limit_bytes=vmem_limit),
    )(x, w1_p, b1_p, w2_p, b2_p, wh_p, bh_p)

    fused = out[:, :T * C]
    if return_fused:
        return fused.reshape(B, T, C)
    # Per-task dict matches the PyTorch new_logits() contract (the narrow,
    # non-128-aligned slices are wrapper-side plumbing).
    return {t: fused[:, i * C:(i + 1) * C] for i, t in enumerate(task_names)}


def init_params(key, d_in, hidden, out_dims):
    """PyTorch-Linear-style init (uniform ±1/sqrt(fan_in)), weights as (in, out)."""
    # TODO(synk): heads with differing out_dim would need per-head padding/masking.
    assert len(set(out_dims.values())) == 1
    c = next(iter(out_dims.values()))
    tasks = list(out_dims.keys())
    T = len(tasks)
    ks = jax.random.split(key, 6)

    def lin(kw, kb, fan_in, fan_out):
        bound = 1.0 / jnp.sqrt(fan_in)
        w = jax.random.uniform(kw, (fan_in, fan_out), jnp.float32, -bound, bound)
        b = jax.random.uniform(kb, (1, fan_out), jnp.float32, -bound, bound)
        return w, b

    w1, b1 = lin(ks[0], ks[1], d_in, hidden)
    w2, b2 = lin(ks[2], ks[3], hidden, hidden)
    bound = 1.0 / jnp.sqrt(hidden)
    wh = jax.random.uniform(ks[4], (T, hidden, c), jnp.float32, -bound, bound)
    bh = jax.random.uniform(ks[5], (T, 1, c), jnp.float32, -bound, bound)
    return (w1, b1, w2, b2, wh, bh), tasks


def reference_forward(x_nchw, params, task_names, *, compute_dtype=jnp.bfloat16):
    """Pure-JAX reference matching the kernel's bf16-operand / f32-accum math."""
    w1, b1, w2, b2, wh, bh = params
    B = x_nchw.shape[0]
    xf = x_nchw.reshape(B, -1).astype(compute_dtype)
    h1 = jnp.maximum(
        jnp.dot(xf, w1.astype(compute_dtype),
                preferred_element_type=jnp.float32) + b1, 0.0)
    h2 = jnp.maximum(
        jnp.dot(h1.astype(compute_dtype), w2.astype(compute_dtype),
                preferred_element_type=jnp.float32) + b2, 0.0)
    return {t: jnp.dot(h2.astype(compute_dtype), wh[i].astype(compute_dtype),
                       preferred_element_type=jnp.float32) + bh[i]
            for i, t in enumerate(task_names)}


if __name__ == "__main__":
    key = jax.random.PRNGKey(0)
    k_x, k_p = jax.random.split(key)

    # Small shapes consistent with the benchmark MLP: B=2, 1x16x16 images,
    # hidden=32, two tasks with 10 classes each (multihead=True).
    B, C_in, IMG = 2, 1, 16
    HIDDEN = 32
    out_dim_cfg = {"1": 10, "2": 10}

    x = jax.random.normal(k_x, (B, C_in, IMG, IMG), jnp.float32)  # NCHW
    params, task_names = init_params(k_p, C_in * IMG * IMG, HIDDEN, out_dim_cfg)

    out = normalnn_forward(x, params, task_names)
    out = jax.tree_util.tree_map(jax.block_until_ready, out)

    ref = reference_forward(x, params, task_names)
    for t in task_names:
        assert out[t].shape == (B, out_dim_cfg[t])
        assert jnp.allclose(out[t], ref[t], atol=2e-3, rtol=2e-3), (
            t, float(jnp.max(jnp.abs(out[t] - ref[t]))))

    print("KERNEL_OK")
</pallas_src>

<mosaic_0001>
module attributes {stable_mosaic.version = 11 : i64} {
  func.func @mlp_multihead_kernel(%arg0: i32, %arg1: memref<2x256xbf16, #tpu.memory_space<vmem>>, %arg2: memref<256x128xbf16, #tpu.memory_space<vmem>>, %arg3: memref<1x128xf32, #tpu.memory_space<vmem>>, %arg4: memref<128x128xbf16, #tpu.memory_space<vmem>>, %arg5: memref<1x128xf32, #tpu.memory_space<vmem>>, %arg6: memref<128x128xbf16, #tpu.memory_space<vmem>>, %arg7: memref<1x128xf32, #tpu.memory_space<vmem>>, %arg8: memref<2x128xf32, #tpu.memory_space<vmem>>) attributes {dimension_semantics = [#tpu.dimension_semantics<parallel>], iteration_bounds = array<i64: 1>, scalar_prefetch = 0 : i64, scratch_operands = 0 : i64, tpu.core_type = #tpu.core_type<tc>, window_params = [{transform_indices = @transform_0, window_bounds = array<i64: 2, 256>}, {pipeline_mode = #tpu.pipeline_mode<synchronous>, transform_indices = @transform_1, window_bounds = array<i64: 256, 128>}, {pipeline_mode = #tpu.pipeline_mode<synchronous>, transform_indices = @transform_2, window_bounds = array<i64: 1, 128>}, {pipeline_mode = #tpu.pipeline_mode<synchronous>, transform_indices = @transform_3, window_bounds = array<i64: 128, 128>}, {pipeline_mode = #tpu.pipeline_mode<synchronous>, transform_indices = @transform_4, window_bounds = array<i64: 1, 128>}, {pipeline_mode = #tpu.pipeline_mode<synchronous>, transform_indices = @transform_5, window_bounds = array<i64: 128, 128>}, {pipeline_mode = #tpu.pipeline_mode<synchronous>, transform_indices = @transform_6, window_bounds = array<i64: 1, 128>}, {transform_indices = @transform_7, window_bounds = array<i64: 2, 128>}]} {
    %c0 = arith.constant 0 : index
    %c0_0 = arith.constant 0 : index
    %0 = vector.load %arg1[%c0, %c0_0] : memref<2x256xbf16, #tpu.memory_space<vmem>>, vector<2x256xbf16>
    %c0_1 = arith.constant 0 : index
    %c0_2 = arith.constant 0 : index
    %1 = vector.load %arg2[%c0_1, %c0_2] : memref<256x128xbf16, #tpu.memory_space<vmem>>, vector<256x128xbf16>
    %cst = arith.constant dense<0.000000e+00> : vector<2x128xf32>
    %2 = tpu.matmul %0, %1, %cst {dimension_numbers = #tpu.dot_dimension_numbers<[1], [0], [0], [1], [0, 0, 1, 1], [], []>} : vector<2x256xbf16>, vector<256x128xbf16>, vector<2x128xf32> -> vector<2x128xf32>
    %c0_3 = arith.constant 0 : index
    %c0_4 = arith.constant 0 : index
    %3 = vector.load %arg3[%c0_3, %c0_4] : memref<1x128xf32, #tpu.memory_space<vmem>>, vector<1x128xf32>
    %4 = vector.broadcast %3 : vector<1x128xf32> to vector<2x128xf32>
    %5 = arith.addf %2, %4 : vector<2x128xf32>
    %cst_5 = arith.constant 0.000000e+00 : f32
    %6 = vector.broadcast %cst_5 : f32 to vector<2x128xf32>
    %7 = arith.maximumf %5, %6 : vector<2x128xf32>
    %8 = arith.truncf %7 : vector<2x128xf32> to vector<2x128xbf16>
    %c0_6 = arith.constant 0 : index
    %c0_7 = arith.constant 0 : index
    %9 = vector.load %arg4[%c0_6, %c0_7] : memref<128x128xbf16, #tpu.memory_space<vmem>>, vector<128x128xbf16>
    %cst_8 = arith.constant dense<0.000000e+00> : vector<2x128xf32>
    %10 = tpu.matmul %8, %9, %cst_8 {dimension_numbers = #tpu.dot_dimension_numbers<[1], [0], [0], [1], [0, 0, 1, 1], [], []>} : vector<2x128xbf16>, vector<128x128xbf16>, vector<2x128xf32> -> vector<2x128xf32>
    %c0_9 = arith.constant 0 : index
    %c0_10 = arith.constant 0 : index
    %11 = vector.load %arg5[%c0_9, %c0_10] : memref<1x128xf32, #tpu.memory_space<vmem>>, vector<1x128xf32>
    %12 = vector.broadcast %11 : vector<1x128xf32> to vector<2x128xf32>
    %13 = arith.addf %10, %12 : vector<2x128xf32>
    %cst_11 = arith.constant 0.000000e+00 : f32
    %14 = vector.broadcast %cst_11 : f32 to vector<2x128xf32>
    %15 = arith.maximumf %13, %14 : vector<2x128xf32>
    %16 = arith.truncf %15 : vector<2x128xf32> to vector<2x128xbf16>
    %c0_12 = arith.constant 0 : index
    %c0_13 = arith.constant 0 : index
    %17 = vector.load %arg6[%c0_12, %c0_13] : memref<128x128xbf16, #tpu.memory_space<vmem>>, vector<128x128xbf16>
    %cst_14 = arith.constant dense<0.000000e+00> : vector<2x128xf32>
    %18 = tpu.matmul %16, %17, %cst_14 {dimension_numbers = #tpu.dot_dimension_numbers<[1], [0], [0], [1], [0, 0, 1, 1], [], []>} : vector<2x128xbf16>, vector<128x128xbf16>, vector<2x128xf32> -> vector<2x128xf32>
    %c0_15 = arith.constant 0 : index
    %c0_16 = arith.constant 0 : index
    %19 = vector.load %arg7[%c0_15, %c0_16] : memref<1x128xf32, #tpu.memory_space<vmem>>, vector<1x128xf32>
    %20 = vector.broadcast %19 : vector<1x128xf32> to vector<2x128xf32>
    %21 = arith.addf %18, %20 : vector<2x128xf32>
    %c0_17 = arith.constant 0 : index
    %c0_18 = arith.constant 0 : index
    %22 = vector.load %arg8[%c0_17, %c0_18] : memref<2x128xf32, #tpu.memory_space<vmem>>, vector<2x128xf32>
    tpu.vector_store %arg8[%c0_17, %c0_18], %21 {strides = array<i32>} : memref<2x128xf32, #tpu.memory_space<vmem>>, vector<2x128xf32>,
    return
  }
  func.func @transform_0(%arg0: i32) -> (i32, i32) {
    %c0_i32 = arith.constant 0 : i32
    %c0_i32_0 = arith.constant 0 : i32
    return %arg0, %c0_i32 : i32, i32
  }
  func.func @transform_1(%arg0: i32) -> (i32, i32) {
    %c0_i32 = arith.constant 0 : i32
    %c0_i32_0 = arith.constant 0 : i32
    %c0_i32_1 = arith.constant 0 : i32
    return %c0_i32, %c0_i32_0 : i32, i32
  }
  func.func @transform_2(%arg0: i32) -> (i32, i32) {
    %c0_i32 = arith.constant 0 : i32
    %c0_i32_0 = arith.constant 0 : i32
    %c0_i32_1 = arith.constant 0 : i32
    return %c0_i32, %c0_i32_0 : i32, i32
  }
  func.func @transform_3(%arg0: i32) -> (i32, i32) {
    %c0_i32 = arith.constant 0 : i32
    %c0_i32_0 = arith.constant 0 : i32
    %c0_i32_1 = arith.constant 0 : i32
    return %c0_i32, %c0_i32_0 : i32, i32
  }
  func.func @transform_4(%arg0: i32) -> (i32, i32) {
    %c0_i32 = arith.constant 0 : i32
    %c0_i32_0 = arith.constant 0 : i32
    %c0_i32_1 = arith.constant 0 : i32
    return %c0_i32, %c0_i32_0 : i32, i32
  }
  func.func @transform_5(%arg0: i32) -> (i32, i32) {
    %c0_i32 = arith.constant 0 : i32
    %c0_i32_0 = arith.constant 0 : i32
    %c0_i32_1 = arith.constant 0 : i32
    return %c0_i32, %c0_i32_0 : i32, i32
  }
  func.func @transform_6(%arg0: i32) -> (i32, i32) {
    %c0_i32 = arith.constant 0 : i32
    %c0_i32_0 = arith.constant 0 : i32
    %c0_i32_1 = arith.constant 0 : i32
    return %c0_i32, %c0_i32_0 : i32, i32
  }
  func.func @transform_7(%arg0: i32) -> (i32, i32) {
    %c0_i32 = arith.constant 0 : i32
    %c0_i32_0 = arith.constant 0 : i32
    return %arg0, %c0_i32 : i32, i32
  }
}

</mosaic_0001>

<llo_original>
// kernel: tpu_custom_call.1
$region0: #{tpu_custom_call.1}
  #allocation0 [shape = 'u32[]', space=smem, size = 0x4, offset = 0x4, fixed_abs, tag = 'smem constant byte address 0x4 - core index']
  #allocation1 [shape = 'u32[144,128]{1,0:T(1,128)}', space=vmem, size = 0x12000, scoped, tag = 'internal scratch']
  %s0 = inlined_call_operand.hbm [shape: bf16[2,256], index: 0, kind: input, shape index: {}]
  %s1 = inlined_call_operand.hbm [shape: bf16[256,128], index: 1, kind: input, shape index: {}]
  %s2 = inlined_call_operand.vmem [shape: f32[1,128], index: 2, kind: input, shape index: {}]
  %s3 = inlined_call_operand.hbm [shape: bf16[128,128], index: 3, kind: input, shape index: {}]
  %s4 = inlined_call_operand.vmem [shape: f32[1,128], index: 4, kind: input, shape index: {}]
  %s5 = inlined_call_operand.hbm [shape: bf16[128,128], index: 5, kind: input, shape index: {}]
  %s6 = inlined_call_operand.vmem [shape: f32[1,128], index: 6, kind: input, shape index: {}]
  %s7 = inlined_call_operand.hbm [shape: f32[2,128], index: 7, kind: output, shape index: {}]
  %s8 = sld [smem:[#allocation0]]
  $region54: #{tpu_custom_call.1} parent=0
    _
  %s10 = ssub.s32 1, %s8
  %s11 = scalar_select 0, %s10, %s8
  $region1: #{tpu_custom_call.1} parent=0
    #allocation2 [shape = 'u8[1024]{0}', space=vmem, size = 0x400, scoped, tag = 'input window, operand 0, single buffered']
    #allocation3 [shape = 's32[1]{0}', space=sflag, size = 0x4, scoped, tag = 'scoped memory for tpu_custom_call.1']
    #allocation4 [shape = 's32[1]{0}', space=sflag, size = 0x4, scoped, tag = 'scoped memory for tpu_custom_call.1']
    #allocation5 [shape = 'u8[65536]{0}', space=vmem, size = 0x10000, scoped, tag = 'input window, operand 1, single buffered']
    #allocation6 [shape = 's32[1]{0}', space=sflag, size = 0x4, scoped, tag = 'scoped memory for tpu_custom_call.1']
    #allocation7 [shape = 'u8[32768]{0}', space=vmem, size = 0x8000, scoped, tag = 'input window, operand 3, single buffered']
    #allocation8 [shape = 'u8[32768]{0}', space=vmem, size = 0x8000, scoped, tag = 'input window, operand 5, single buffered']
    #allocation9 [shape = 's32[1]{0}', space=sflag, size = 0x4, scoped, tag = 'scoped memory for tpu_custom_call.1']
    #allocation10 [shape = 'u8[1024]{0}', space=vmem, size = 0x400, scoped, tag = 'output window, operand 0, single buffered']
    %12 = vsyncpa [#allocation3], 0
    %13 = vsyncpa [#allocation6], 0
    %14 = vsyncpa [#allocation9], 0
    %15 = vsyncpa [#allocation4], 0
    // Predicated region
    $region2: #{tpu_custom_call.1} parent=1 // pred_check
      _
    $region3: #{tpu_custom_call.1} parent=1 // pred_check_branch
      %17 = sbr.rel (0) target = $region5
    $region4: #{tpu_custom_call.1} parent=1 // pred_region
      %s19 = ssub.s32 32, 32
      %20 = vsyncadd [#allocation3], %s19
      %s22 = sshll.u32 [#allocation2], 4
      %s23 = int_to_ptr.vmem [resolvable:$true] %s22
      %25 = dma.hbm_to_vmem [thread:$0]  %s0, 32, %s23, [#allocation3]
    $region5: #{tpu_custom_call.1} parent=1 // pred_fallthru
      _
    // Predicated region
    $region6: #{tpu_custom_call.1} parent=1 // pred_check
      _
    $region7: #{tpu_custom_call.1} parent=1 // pred_check_branch
      %27 = sbr.rel (0) target = $region9
    $region8: #{tpu_custom_call.1} parent=1 // pred_region
      %s29 = ssub.s32 2048, 2048
      %30 = vsyncadd [#allocation6], %s29
      %s31 = sshll.u32 [#allocation5], 4
      %s32 = int_to_ptr.vmem [resolvable:$true] %s31
      %37 = dma.hbm_to_vmem [thread:$0]  %s1, 2048, %s32, [#allocation6], 64, 64, 4
    $region9: #{tpu_custom_call.1} parent=1 // pred_fallthru
      _
    // Predicated region
    $region10: #{tpu_custom_call.1} parent=1 // pred_check
      _
    $region11: #{tpu_custom_call.1} parent=1 // pred_check_branch
      %39 = sbr.rel (0) target = $region13
    $region12: #{tpu_custom_call.1} parent=1 // pred_region
      _
    $region13: #{tpu_custom_call.1} parent=1 // pred_fallthru
      _
    // Predicated region
    $region14: #{tpu_custom_call.1} parent=1 // pred_check
      _
    $region15: #{tpu_custom_call.1} parent=1 // pred_check_branch
      %41 = sbr.rel (0) target = $region17
    $region16: #{tpu_custom_call.1} parent=1 // pred_region
      %s43 = ssub.s32 1024, 1024
      %44 = vsyncadd [#allocation6], %s43
      %s45 = sshll.u32 [#allocation7], 4
      %s46 = int_to_ptr.vmem [resolvable:$true] %s45
      %51 = dma.hbm_to_vmem [thread:$0]  %s3, 1024, %s46, [#allocation6], 64, 64, 4
    $region17: #{tpu_custom_call.1} parent=1 // pred_fallthru
      _
    // Predicated region
    $region18: #{tpu_custom_call.1} parent=1 // pred_check
      _
    $region19: #{tpu_custom_call.1} parent=1 // pred_check_branch
      %53 = sbr.rel (0) target = $region21
    $region20: #{tpu_custom_call.1} parent=1 // pred_region
      _
    $region21: #{tpu_custom_call.1} parent=1 // pred_fallthru
      _
    // Predicated region
    $region22: #{tpu_custom_call.1} parent=1 // pred_check
      _
    $region23: #{tpu_custom_call.1} parent=1 // pred_check_branch
      %55 = sbr.rel (0) target = $region25
    $region24: #{tpu_custom_call.1} parent=1 // pred_region
      %s57 = ssub.s32 1024, 1024
      %58 = vsyncadd [#allocation9], %s57
      %s59 = sshll.u32 [#allocation8], 4
      %s60 = int_to_ptr.vmem [resolvable:$true] %s59
      %65 = dma.hbm_to_vmem [thread:$0]  %s5, 1024, %s60, [#allocation9], 64, 64, 4
    $region25: #{tpu_custom_call.1} parent=1 // pred_fallthru
      _
    // Predicated region
    $region26: #{tpu_custom_call.1} parent=1 // pred_check
      _
    $region27: #{tpu_custom_call.1} parent=1 // pred_check_branch
      %67 = sbr.rel (0) target = $region29
    $region28: #{tpu_custom_call.1} parent=1 // pred_region
      _
    $region29: #{tpu_custom_call.1} parent=1 // pred_fallthru
      _
    // Predicated region
    $region30: #{tpu_custom_call.1} parent=1 // pred_check
      _
    $region31: #{tpu_custom_call.1} parent=1 // pred_check_branch
      %69 = sbr.rel (0) target = $region33
    $region32: #{tpu_custom_call.1} parent=1 // pred_region
      %70 = dma.done [#allocation3], 32
    $region33: #{tpu_custom_call.1} parent=1 // pred_fallthru
      _
    // Predicated region
    $region34: #{tpu_custom_call.1} parent=1 // pred_check
      _
    $region35: #{tpu_custom_call.1} parent=1 // pred_check_branch
      %72 = sbr.rel (0) target = $region37
    $region36: #{tpu_custom_call.1} parent=1 // pred_region
      %73 = dma.done [#allocation6], 2048
    $region37: #{tpu_custom_call.1} parent=1 // pred_fallthru
      _
    // Predicated region
    $region38: #{tpu_custom_call.1} parent=1 // pred_check
      _
    $region39: #{tpu_custom_call.1} parent=1 // pred_check_branch
      %75 = sbr.rel (0) target = $region41
    $region40: #{tpu_custom_call.1} parent=1 // pred_region
      %76 = dma.done [#allocation6], 1024
    $region41: #{tpu_custom_call.1} parent=1 // pred_fallthru
      _
    // Predicated region
    $region42: #{tpu_custom_call.1} parent=1 // pred_check
      _
    $region43: #{tpu_custom_call.1} parent=1 // pred_check_branch
      %78 = sbr.rel (0) target = $region45
    $region44: #{tpu_custom_call.1} parent=1 // pred_region
      %79 = dma.done [#allocation9], 1024
    $region45: #{tpu_custom_call.1} parent=1 // pred_fallthru
      _
    %v81 = vld [vmem:[#allocation2] sm:$0x3]
    %v82 = vld [vmem:[#allocation5] sm:$0xf]
    %v83 = vld [vmem:[#allocation5 + $0x4] sm:$0xf]
    %v84 = vld [vmem:[#allocation5 + $0x8] sm:$0xf]
    %v85 = vld [vmem:[#allocation5 + $0xc] sm:$0xf]
    %v86 = vld [vmem:[#allocation5 + $0x10] sm:$0xf]
    %v87 = vld [vmem:[#allocation5 + $0x14] sm:$0xf]
    %v88 = vld [vmem:[#allocation5 + $0x18] sm:$0xf]
    %v89 = vld [vmem:[#allocation5 + $0x1c] sm:$0xf]
    %v90 = vld [vmem:[#allocation5 + $0x20] sm:$0xf]
    %v91 = vld [vmem:[#allocation5 + $0x24] sm:$0xf]
    %v92 = vld [vmem:[#allocation5 + $0x28] sm:$0xf]
    %v93 = vld [vmem:[#allocation5 + $0x2c] sm:$0xf]
    %v94 = vld [vmem:[#allocation5 + $0x30] sm:$0xf]
    %v95 = vld [vmem:[#allocation5 + $0x34] sm:$0xf]
    %v96 = vld [vmem:[#allocation5 + $0x38] sm:$0xf]
    %v97 = vld [vmem:[#allocation5 + $0x3c] sm:$0xf]
    %v98 = vld [vmem:[#allocation5 + $0x40] sm:$0xf]
    %v99 = vld [vmem:[#allocation5 + $0x44] sm:$0xf]
    %v100 = vld [vmem:[#allocation5 + $0x48] sm:$0xf]
    %v101 = vld [vmem:[#allocation5 + $0x4c] sm:$0xf]
    %v102 = vld [vmem:[#allocation5 + $0x50] sm:$0xf]
    %v103 = vld [vmem:[#allocation5 + $0x54] sm:$0xf]
    %v104 = vld [vmem:[#allocation5 + $0x58] sm:$0xf]
    %v105 = vld [vmem:[#allocation5 + $0x5c] sm:$0xf]
    %v106 = vld [vmem:[#allocation5 + $0x60] sm:$0xf]
    %v107 = vld [vmem:[#allocation5 + $0x64] sm:$0xf]
    %v108 = vld [vmem:[#allocation5 + $0x68] sm:$0xf]
    %v109 = vld [vmem:[#allocation5 + $0x6c] sm:$0xf]
    %v110 = vld [vmem:[#allocation5 + $0x70] sm:$0xf]
    %v111 = vld [vmem:[#allocation5 + $0x74] sm:$0xf]
    %v112 = vld [vmem:[#allocation5 + $0x78] sm:$0xf]
    %v113 = vld [vmem:[#allocation5 + $0x7c] sm:$0xf]
    %v114 = vld [vmem:[%s2] sm:$0x1]
    %v116 = vlaneseq
    %v117 = vshrl.u32 %v116, 7
    %v118 = vsub.s32 0, %v117
    %v119 = vrot.slane %v114, %v118
    %v123 = vunpack.c.l.s4 1966171168
    %v124 = vunpack.c.0.s8 %v123
    %v125 = vlaneseq
    %v126 = vshrl.u32 %v125, 7
    %v127 = vsub.s32 %v124, %v126
    %v128 = vrot.slane %v81, %v127
    %v129 = vcombine.high %v128, %v128
    %v131 = vunpack.c.l.s4 1966171168
    %v132 = vunpack.c.0.s8 %v131
    %v133 = vlaneseq
    %v134 = vshrl.u32 %v133, 7
    %v135 = vsub.s32 %v132, %v134
    %v136 = vrot.slane %v128, %v135
    %v138 = vunpack.c.l.s4 1966171168
    %v139 = vunpack.c.0.s8 %v138
    %v140 = vlaneseq
    %v141 = vshrl.u32 %v140, 7
    %v142 = vsub.s32 %v139, %v141
    %v143 = vrot.slane %v129, %v142
    %v178 = vunpack.c.l.b16 %v82
    %v179 = vunpack.c.l.b16 %v83
    %v180 = vunpack.c.l.b16 %v84
    %v181 = vunpack.c.l.b16 %v85
    %v182 = vunpack.c.l.b16 %v86
    %v183 = vunpack.c.l.b16 %v87
    %v184 = vunpack.c.l.b16 %v88
    %v185 = vunpack.c.l.b16 %v89
    %v186 = vunpack.c.l.b16 %v90
    %v187 = vunpack.c.l.b16 %v91
    %v188 = vunpack.c.l.b16 %v92
    %v189 = vunpack.c.l.b16 %v93
    %v190 = vunpack.c.l.b16 %v94
    %v191 = vunpack.c.l.b16 %v95
    %v192 = vunpack.c.l.b16 %v96
    %v193 = vunpack.c.l.b16 %v97
    %v194 = vunpack.c.l.b16 %v98
    %v195 = vunpack.c.l.b16 %v99
    %v196 = vunpack.c.l.b16 %v100
    %v197 = vunpack.c.l.b16 %v101
    %v198 = vunpack.c.l.b16 %v102
    %v199 = vunpack.c.l.b16 %v103
    %v200 = vunpack.c.l.b16 %v104
    %v201 = vunpack.c.l.b16 %v105
    %v202 = vunpack.c.l.b16 %v106
    %v203 = vunpack.c.l.b16 %v107
    %v204 = vunpack.c.l.b16 %v108
    %v205 = vunpack.c.l.b16 %v109
    %v206 = vunpack.c.l.b16 %v110
    %v207 = vunpack.c.l.b16 %v111
    %v208 = vunpack.c.l.b16 %v112
    %v209 = vunpack.c.l.b16 %v113
    %v210 = vpack.c.b16 %v179, %v178
    %v211 = vpack.c.b16 %v181, %v180
    %v212 = vpack.c.b16 %v183, %v182
    %v213 = vpack.c.b16 %v185, %v184
    %v214 = vpack.c.b16 %v187, %v186
    %v215 = vpack.c.b16 %v189, %v188
    %v216 = vpack.c.b16 %v191, %v190
    %v217 = vpack.c.b16 %v193, %v192
    %v218 = vpack.c.b16 %v195, %v194
    %v219 = vpack.c.b16 %v197, %v196
    %v220 = vpack.c.b16 %v199, %v198
    %v221 = vpack.c.b16 %v201, %v200
    %v222 = vpack.c.b16 %v203, %v202
    %v223 = vpack.c.b16 %v205, %v204
    %v224 = vpack.c.b16 %v207, %v206
    %v225 = vpack.c.b16 %v209, %v208
    %242 = vmatprep.subr.bf16.mxu0 0
    %243 = vmatpush1.bf16.msra.mxu0 %v217
    %244 = vmatprep.subr.bf16.mxu0 0
    %245 = vmatpush1.bf16.msra.mxu0 %v216
    %246 = vmatprep.subr.bf16.mxu0 0
    %247 = vmatpush1.bf16.msra.mxu0 %v215
    %248 = vmatprep.subr.bf16.mxu0 0
    %249 = vmatpush1.bf16.msra.mxu0 %v214
    %250 = vmatprep.subr.bf16.mxu0 0
    %251 = vmatpush1.bf16.msra.mxu0 %v213
    %252 = vmatprep.subr.bf16.mxu0 0
    %253 = vmatpush1.bf16.msra.mxu0 %v212
    %254 = vmatprep.subr.bf16.mxu0 0
    %255 = vmatpush1.bf16.msra.mxu0 %v211
    %256 = vmatprep.subr.bf16.mxu0 0
    %257 = vmatpush1.bf16.msra.mxu0 %v210
    %258 = vmatprep.subr.bf16.mxu0 0
    %259 = vmatpush2.bf16.msra.mxu0 %v225
    %260 = vmatprep.subr.bf16.mxu0 0
    %261 = vmatpush2.bf16.msra.mxu0 %v224
    %262 = vmatprep.subr.bf16.mxu0 0
    %263 = vmatpush2.bf16.msra.mxu0 %v223
    %264 = vmatprep.subr.bf16.mxu0 0
    %265 = vmatpush2.bf16.msra.mxu0 %v222
    %266 = vmatprep.subr.bf16.mxu0 0
    %267 = vmatpush2.bf16.msra.mxu0 %v221
    %268 = vmatprep.subr.bf16.mxu0 0
    %269 = vmatpush2.bf16.msra.mxu0 %v220
    %270 = vmatprep.subr.bf16.mxu0 0
    %271 = vmatpush2.bf16.msra.mxu0 %v219
    %272 = vmatprep.subr.bf16.mxu0 0
    %273 = vmatpush2.bf16.msra.mxu0 %v218
    %274 = vmatprep.mubr.bf16.mxu0 %v143
    %275 = vmatmul.mubr.bf16.gmra.mxu0 %v136
    %v276 = vpop.f32.mrf.mxu0
    %v277 = vadd.f32 %v119, %v276
    %v278 = vpop.f32.mrf.mxu0
    %v279 = vpop.f32.mrf.mxu0
    %v280 = vpop.f32.mrf.mxu0
    %281 = vdwg.mxu0
    %v282 = vmax.f32 %v277, 0.0
    %v283 = vpack.c.bf16 %v282, %v282
    %v284 = vld [vmem:[#allocation7] sm:$0xf]
    %v285 = vld [vmem:[#allocation7 + $0x4] sm:$0xf]
    %v286 = vld [vmem:[#allocation7 + $0x8] sm:$0xf]
    %v287 = vld [vmem:[#allocation7 + $0xc] sm:$0xf]
    %v288 = vld [vmem:[#allocation7 + $0x10] sm:$0xf]
    %v289 = vld [vmem:[#allocation7 + $0x14] sm:$0xf]
    %v290 = vld [vmem:[#allocation7 + $0x18] sm:$0xf]
    %v291 = vld [vmem:[#allocation7 + $0x1c] sm:$0xf]
    %v292 = vld [vmem:[#allocation7 + $0x20] sm:$0xf]
    %v293 = vld [vmem:[#allocation7 + $0x24] sm:$0xf]
    %v294 = vld [vmem:[#allocation7 + $0x28] sm:$0xf]
    %v295 = vld [vmem:[#allocation7 + $0x2c] sm:$0xf]
    %v296 = vld [vmem:[#allocation7 + $0x30] sm:$0xf]
    %v297 = vld [vmem:[#allocation7 + $0x34] sm:$0xf]
    %v298 = vld [vmem:[#allocation7 + $0x38] sm:$0xf]
    %v299 = vld [vmem:[#allocation7 + $0x3c] sm:$0xf]
    %v300 = vld [vmem:[%s4] sm:$0x1]
    %v302 = vlaneseq
    %v303 = vshrl.u32 %v302, 7
    %v304 = vsub.s32 0, %v303
    %v305 = vrot.slane %v300, %v304
    %v323 = vunpack.c.l.b16 %v284
    %v324 = vunpack.c.l.b16 %v285
    %v325 = vunpack.c.l.b16 %v286
    %v326 = vunpack.c.l.b16 %v287
    %v327 = vunpack.c.l.b16 %v288
    %v328 = vunpack.c.l.b16 %v289
    %v329 = vunpack.c.l.b16 %v290
    %v330 = vunpack.c.l.b16 %v291
    %v331 = vunpack.c.l.b16 %v292
    %v332 = vunpack.c.l.b16 %v293
    %v333 = vunpack.c.l.b16 %v294
    %v334 = vunpack.c.l.b16 %v295
    %v335 = vunpack.c.l.b16 %v296
    %v336 = vunpack.c.l.b16 %v297
    %v337 = vunpack.c.l.b16 %v298
    %v338 = vunpack.c.l.b16 %v299
    %v339 = vpack.c.b16 %v324, %v323
    %v340 = vpack.c.b16 %v326, %v325
    %v341 = vpack.c.b16 %v328, %v327
    %v342 = vpack.c.b16 %v330, %v329
    %v343 = vpack.c.b16 %v332, %v331
    %v344 = vpack.c.b16 %v334, %v333
    %v345 = vpack.c.b16 %v336, %v335
    %v346 = vpack.c.b16 %v338, %v337
    %355 = vmatprep.subr.bf16.mxu0 0
    %356 = vmatpush1.bf16.msra.mxu0 %v346
    %357 = vmatprep.subr.bf16.mxu0 0
    %358 = vmatpush1.bf16.msra.mxu0 %v345
    %359 = vmatprep.subr.bf16.mxu0 0
    %360 = vmatpush1.bf16.msra.mxu0 %v344
    %361 = vmatprep.subr.bf16.mxu0 0
    %362 = vmatpush1.bf16.msra.mxu0 %v343
    %363 = vmatprep.subr.bf16.mxu0 0
    %364 = vmatpush1.bf16.msra.mxu0 %v342
    %365 = vmatprep.subr.bf16.mxu0 0
    %366 = vmatpush1.bf16.msra.mxu0 %v341
    %367 = vmatprep.subr.bf16.mxu0 0
    %368 = vmatpush1.bf16.msra.mxu0 %v340
    %369 = vmatprep.subr.bf16.mxu0 0
    %370 = vmatpush1.bf16.msra.mxu0 %v339
    %371 = vmatprep.subr.bf16.mxu0 0
    %372 = vmatpush2.bf16.msra.mxu0 0
    %373 = vmatprep.subr.bf16.mxu0 0
    %374 = vmatpush2.bf16.msra.mxu0 0
    %375 = vmatprep.subr.bf16.mxu0 0
    %376 = vmatpush2.bf16.msra.mxu0 0
    %377 = vmatprep.subr.bf16.mxu0 0
    %378 = vmatpush2.bf16.msra.mxu0 0
    %379 = vmatprep.subr.bf16.mxu0 0
    %380 = vmatpush2.bf16.msra.mxu0 0
    %381 = vmatprep.subr.bf16.mxu0 0
    %382 = vmatpush2.bf16.msra.mxu0 0
    %383 = vmatprep.subr.bf16.mxu0 0
    %384 = vmatpush2.bf16.msra.mxu0 0
    %385 = vmatprep.subr.bf16.mxu0 0
    %386 = vmatpush2.bf16.msra.mxu0 0
    %387 = vmatprep.mubr.bf16.mxu0 0
    %388 = vmatmul.mubr.bf16.gmra.mxu0 %v283
    %v389 = vpop.f32.mrf.mxu0
    %v390 = vadd.f32 %v305, %v389
    %v391 = vpop.f32.mrf.mxu0
    %v392 = vpop.f32.mrf.mxu0
    %v393 = vpop.f32.mrf.mxu0
    %394 = vdwg.mxu0
    %v395 = vmax.f32 %v390, 0.0
    %v396 = vpack.c.bf16 %v395, %v395
    %v397 = vld [vmem:[#allocation8] sm:$0xf]
    %v398 = vld [vmem:[#allocation8 + $0x4] sm:$0xf]
    %v399 = vld [vmem:[#allocation8 + $0x8] sm:$0xf]
    %v400 = vld [vmem:[#allocation8 + $0xc] sm:$0xf]
    %v401 = vld [vmem:[#allocation8 + $0x10] sm:$0xf]
    %v402 = vld [vmem:[#allocation8 + $0x14] sm:$0xf]
    %v403 = vld [vmem:[#allocation8 + $0x18] sm:$0xf]
    %v404 = vld [vmem:[#allocation8 + $0x1c] sm:$0xf]
    %v405 = vld [vmem:[#allocation8 + $0x20] sm:$0xf]
    %v406 = vld [vmem:[#allocation8 + $0x24] sm:$0xf]
    %v407 = vld [vmem:[#allocation8 + $0x28] sm:$0xf]
    %v408 = vld [vmem:[#allocation8 + $0x2c] sm:$0xf]
    %v409 = vld [vmem:[#allocation8 + $0x30] sm:$0xf]
    %v410 = vld [vmem:[#allocation8 + $0x34] sm:$0xf]
    %v411 = vld [vmem:[#allocation8 + $0x38] sm:$0xf]
    %v412 = vld [vmem:[#allocation8 + $0x3c] sm:$0xf]
    %v413 = vld [vmem:[%s6] sm:$0x1]
    %v415 = vlaneseq
    %v416 = vshrl.u32 %v415, 7
    %v417 = vsub.s32 0, %v416
    %v418 = vrot.slane %v413, %v417
    %v436 = vunpack.c.l.b16 %v397
    %v437 = vunpack.c.l.b16 %v398
    %v438 = vunpack.c.l.b16 %v399
    %v439 = vunpack.c.l.b16 %v400
    %v440 = vunpack.c.l.b16 %v401
    %v441 = vunpack.c.l.b16 %v402
    %v442 = vunpack.c.l.b16 %v403
    %v443 = vunpack.c.l.b16 %v404
    %v444 = vunpack.c.l.b16 %v405
    %v445 = vunpack.c.l.b16 %v406
    %v446 = vunpack.c.l.b16 %v407
    %v447 = vunpack.c.l.b16 %v408
    %v448 = vunpack.c.l.b16 %v409
    %v449 = vunpack.c.l.b16 %v410
    %v450 = vunpack.c.l.b16 %v411
    %v451 = vunpack.c.l.b16 %v412
    %v452 = vpack.c.b16 %v437, %v436
    %v453 = vpack.c.b16 %v439, %v438
    %v454 = vpack.c.b16 %v441, %v440
    %v455 = vpack.c.b16 %v443, %v442
    %v456 = vpack.c.b16 %v445, %v444
    %v457 = vpack.c.b16 %v447, %v446
    %v458 = vpack.c.b16 %v449, %v448
    %v459 = vpack.c.b16 %v451, %v450
    %468 = vmatprep.subr.bf16.mxu0 0
    %469 = vmatpush1.bf16.msra.mxu0 %v459
    %470 = vmatprep.subr.bf16.mxu0 0
    %471 = vmatpush1.bf16.msra.mxu0 %v458
    %472 = vmatprep.subr.bf16.mxu0 0
    %473 = vmatpush1.bf16.msra.mxu0 %v457
    %474 = vmatprep.subr.bf16.mxu0 0
    %475 = vmatpush1.bf16.msra.mxu0 %v456
    %476 = vmatprep.subr.bf16.mxu0 0
    %477 = vmatpush1.bf16.msra.mxu0 %v455
    %478 = vmatprep.subr.bf16.mxu0 0
    %479 = vmatpush1.bf16.msra.mxu0 %v454
    %480 = vmatprep.subr.bf16.mxu0 0
    %481 = vmatpush1.bf16.msra.mxu0 %v453
    %482 = vmatprep.subr.bf16.mxu0 0
    %483 = vmatpush1.bf16.msra.mxu0 %v452
    %484 = vmatprep.subr.bf16.mxu0 0
    %485 = vmatpush2.bf16.msra.mxu0 0
    %486 = vmatprep.subr.bf16.mxu0 0
    %487 = vmatpush2.bf16.msra.mxu0 0
    %488 = vmatprep.subr.bf16.mxu0 0
    %489 = vmatpush2.bf16.msra.mxu0 0
    %490 = vmatprep.subr.bf16.mxu0 0
    %491 = vmatpush2.bf16.msra.mxu0 0
    %492 = vmatprep.subr.bf16.mxu0 0
    %493 = vmatpush2.bf16.msra.mxu0 0
    %494 = vmatprep.subr.bf16.mxu0 0
    %495 = vmatpush2.bf16.msra.mxu0 0
    %496 = vmatprep.subr.bf16.mxu0 0
    %497 = vmatpush2.bf16.msra.mxu0 0
    %498 = vmatprep.subr.bf16.mxu0 0
    %499 = vmatpush2.bf16.msra.mxu0 0
    %500 = vmatprep.mubr.bf16.mxu0 0
    %501 = vmatmul.mubr.bf16.gmra.mxu0 %v396
    %v502 = vpop.f32.mrf.mxu0
    %v503 = vadd.f32 %v418, %v502
    %v504 = vpop.f32.mrf.mxu0
    %v505 = vpop.f32.mrf.mxu0
    %v506 = vpop.f32.mrf.mxu0
    %507 = vdwg.mxu0
    %508 = vst [vmem:[#allocation10] sm:$0x3] %v503
    // Predicated region
    $region46: #{tpu_custom_call.1} parent=1 // pred_check
      _
    $region47: #{tpu_custom_call.1} parent=1 // pred_check_branch
      %510 = sbr.rel (0) target = $region49
    $region48: #{tpu_custom_call.1} parent=1 // pred_region
      %s512 = ssub.s32 32, 32
      %513 = vsyncadd [#allocation4], %s512
      %s515 = sshll.u32 [#allocation10], 4
      %s516 = int_to_ptr.vmem [resolvable:$true] %s515
      %518 = dma.vmem_to_hbm [thread:$0]  %s516, 32, %s7, [#allocation4]
    $region49: #{tpu_custom_call.1} parent=1 // pred_fallthru
      _
    // Predicated region
    $region50: #{tpu_custom_call.1} parent=1 // pred_check
      _
    $region51: #{tpu_custom_call.1} parent=1 // pred_check_branch
      %520 = sbr.rel (0) target = $region53
    $region52: #{tpu_custom_call.1} parent=1 // pred_region
      %521 = dma.done [#allocation4], 32
    $region53: #{tpu_custom_call.1} parent=1 // pred_fallthru
      _
    %522 = vsyncpa [#allocation3], 1
    %523 = vsyncpa [#allocation6], 1
    %524 = vsyncpa [#allocation9], 1
    %525 = vsyncpa [#allocation4], 1

</llo_original>
